<compile_context>
chip_gen: v7x
topology: tpu7x:2x2x1
jax: 0.10.0
libtpu: 0.0.40
codegen_flags: <defaults>
</compile_context>

<pallas_src>
import jax
import jax.numpy as jnp
from jax.experimental import pallas as pl
from jax.experimental.pallas import tpu as pltpu

HIDDEN = 256
_LANE = 128


def _round_up(x, m):
    return ((x + m - 1) // m) * m


def _fwd_kernel(srange_ref,                 # SMEM: (1,) f32
                x_ref, u_ref,               # [bm, in_pad], [bm, S_pad]
                w1_ref, b1_ref,             # [in_pad, H],  [1, H]
                w2_ref, b2_ref,             # [H, H],       [1, H]
                w34_ref, b34_ref,           # [H, 2*S_pad], [1, 2*S_pad]
                out_ref):                   # [bm, 3*S_pad]  (mu | logvar | z)
    s_pad = u_ref.shape[-1]

    # fc1 + relu: state and action live in adjacent lanes of one input slab,
    # so fc1 is a single MXU matmul (no host concat, no separate action DMA).
    h1 = jnp.dot(x_ref[...], w1_ref[...], preferred_element_type=jnp.float32)
    h1 = jnp.maximum(h1 + b1_ref[...], 0.0)

    # fc2 + relu
    h2 = jnp.dot(h1, w2_ref[...], preferred_element_type=jnp.float32)
    h2 = jnp.maximum(h2 + b2_ref[...], 0.0)

    # Fused fc3|fc4 head: one matmul, split at the 128-aligned S_pad boundary.
    head = jnp.dot(h2, w34_ref[...], preferred_element_type=jnp.float32) + b34_ref[...]
    ds = head[:, :s_pad]
    logvar = head[:, s_pad:]

    # mu = ds + state.  Lanes [S, S+A) of x carry the action, so those mu lanes are
    # "polluted" — by construction the host only ever slices lanes [0, S) out.
    mu = ds + x_ref[:, :s_pad]

    # z = low + u01*(high - low) == mu + std_range*std*u  with u drawn in [-1, 1).
    std = jnp.exp(0.5 * logvar)
    z = mu + (srange_ref[0] * std) * u_ref[...]

    # Single packed lane-dense output: full 128-lane-multiple, aligned stores.
    out_ref[:, :s_pad] = mu
    out_ref[:, s_pad:2 * s_pad] = logvar
    out_ref[:, 2 * s_pad:] = z


def p_forward_model_uniform(state, action, packed_params, rng_key, std_range,
                            *, block_m=512):
    """state: [B, S], action: [B, A]; packed_params from pack_params().

    Returns (mu, logvar, z), each [B, S] float32.  z ~ U[mu - r*std, mu + r*std).
    """
    B, S = state.shape
    A = action.shape[-1]
    w1, b1, w2, b2, w34, b34 = packed_params
    in_pad = w1.shape[0]
    S_pad = w34.shape[1] // 2

    # Tile selection: minimize last-tile waste; force >= 2 tiles for larger B so the
    # "parallel" grid axis can shard across v7x's two TensorCores.
    n_tiles = max(1, -(-B // block_m))
    if B >= 64:
        n_tiles = max(n_tiles, 2)
    bm = _round_up(-(-B // n_tiles), 8)
    B_pad = n_tiles * bm

    # One padded input slab: state in lanes [0, S), action in lanes [S, S+A), zeros
    # elsewhere (single host-side packing pass; the only per-call layout work).
    x = (jnp.zeros((B_pad, in_pad), jnp.float32)
         .at[:B, :S].set(state.astype(jnp.float32))
         .at[:B, S:S + A].set(action.astype(jnp.float32)))

    # Uniform draws in [-1, 1), generated on host (portable; see TODO at top of file).
    u = jax.random.uniform(rng_key, (B_pad, S_pad), jnp.float32, -1.0, 1.0)

    srange_arr = jnp.reshape(jnp.asarray(std_range, jnp.float32), (1,))

    smem = pl.BlockSpec(memory_space=pltpu.MemorySpace.SMEM)
    rows = lambda w: pl.BlockSpec((bm, w), lambda i: (i, 0))   # batch-tiled arrays
    whole = lambda a: pl.BlockSpec(a.shape, lambda i: (0, 0))  # weights: VMEM-resident

    out = pl.pallas_call(
        _fwd_kernel,
        grid=(n_tiles,),
        in_specs=[smem,
                  rows(in_pad), rows(S_pad),
                  whole(w1), whole(b1),
                  whole(w2), whole(b2),
                  whole(w34), whole(b34)],
        out_specs=rows(3 * S_pad),
        out_shape=jax.ShapeDtypeStruct((B_pad, 3 * S_pad), jnp.float32),
        compiler_params=pltpu.CompilerParams(dimension_semantics=("parallel",)),
    )(srange_arr, x, u, w1, b1, w2, b2, w34, b34)

    mu = out[:B, :S]
    logvar = out[:B, S_pad:S_pad + S]
    z = out[:B, 2 * S_pad:2 * S_pad + S]
    return mu, logvar, z


def _xavier_uniform(key, fan_in, fan_out):
    bound = (6.0 / (fan_in + fan_out)) ** 0.5
    return jax.random.uniform(key, (fan_in, fan_out), jnp.float32, -bound, bound)


def init_params(key, state_dim, action_dim):
    """Raw parameters matching the PyTorch module (weights stored [in, out])."""
    in_dim = state_dim + action_dim
    k1, k2, k3, k4 = jax.random.split(key, 4)
    w1 = _xavier_uniform(k1, in_dim, HIDDEN)
    w2 = _xavier_uniform(k2, HIDDEN, HIDDEN)
    w3 = _xavier_uniform(k3, HIDDEN, state_dim)
    w4 = _xavier_uniform(k4, HIDDEN, state_dim)
    b1 = jnp.zeros((1, HIDDEN), jnp.float32)
    b2 = jnp.zeros((1, HIDDEN), jnp.float32)
    b3 = jnp.zeros((1, state_dim), jnp.float32)
    b4 = jnp.zeros((1, state_dim), jnp.float32)
    return (w1, b1, w2, b2, w3, b3, w4, b4)


def pack_params(params, state_dim, action_dim):
    """One-time repack for the kernel (do this once, outside the per-step call):
      * W1 rows padded to in_pad = round_up(S+A, 128) to match the packed input slab,
      * W3|W4 fused into one lane-padded [H, 2*S_pad] head (+ fused bias)."""
    w1, b1, w2, b2, w3, b3, w4, b4 = params
    in_dim = state_dim + action_dim
    in_pad = _round_up(in_dim, _LANE)
    S_pad = _round_up(state_dim, _LANE)
    w1p = jnp.zeros((in_pad, HIDDEN), jnp.float32).at[:in_dim].set(w1)
    w34 = (jnp.zeros((HIDDEN, 2 * S_pad), jnp.float32)
           .at[:, :state_dim].set(w3)
           .at[:, S_pad:S_pad + state_dim].set(w4))
    b34 = (jnp.zeros((1, 2 * S_pad), jnp.float32)
           .at[:, :state_dim].set(b3)
           .at[:, S_pad:S_pad + state_dim].set(b4))
    return (w1p, b1, w2, b2, w34, b34)


if __name__ == "__main__":
    state_dim, action_dim = 16, 8
    batch = 8
    std_range = 1.5

    key = jax.random.PRNGKey(0)
    kp, ks, ka, ku = jax.random.split(key, 4)

    params = init_params(kp, state_dim, action_dim)
    packed = pack_params(params, state_dim, action_dim)
    state = jax.random.normal(ks, (batch, state_dim), jnp.float32)
    action = jax.random.normal(ka, (batch, action_dim), jnp.float32)

    fwd = jax.jit(p_forward_model_uniform)
    mu, logvar, z = fwd(state, action, packed, ku, std_range)
    jax.block_until_ready((mu, logvar, z))

    # pure-JAX reference (original, unfused math)
    w1, b1, w2, b2, w3, b3, w4, b4 = params
    s_in = jnp.concatenate([state, action], axis=-1)
    h1 = jnp.maximum(s_in @ w1 + b1, 0.0)
    h2 = jnp.maximum(h1 @ w2 + b2, 0.0)
    mu_ref = (h2 @ w3 + b3) + state
    lv_ref = h2 @ w4 + b4

    assert mu.shape == (batch, state_dim) and logvar.shape == (batch, state_dim)
    assert z.shape == (batch, state_dim)
    assert jnp.allclose(mu, mu_ref, atol=1e-4, rtol=1e-4)
    assert jnp.allclose(logvar, lv_ref, atol=1e-4, rtol=1e-4)

    # z is a sample from U[mu - r*std, mu + r*std): check bounds & finiteness
    # (jax.random draws intentionally do not bit-match PyTorch's np.random stream).
    std_ref = jnp.exp(0.5 * lv_ref)
    low = mu_ref - std_range * std_ref
    high = mu_ref + std_range * std_ref
    assert bool(jnp.all(jnp.isfinite(z)))
    assert bool(jnp.all(z >= low - 1e-3)) and bool(jnp.all(z <= high + 1e-3))

    print("KERNEL_OK")
</pallas_src>

<mosaic_0001>
module attributes {stable_mosaic.version = 11 : i64} {
  func.func @_fwd_kernel(%arg0: i32, %arg1: memref<1xf32, #tpu.memory_space<smem>>, %arg2: memref<8x128xf32, #tpu.memory_space<vmem>>, %arg3: memref<8x128xf32, #tpu.memory_space<vmem>>, %arg4: memref<128x256xf32, #tpu.memory_space<vmem>>, %arg5: memref<1x256xf32, #tpu.memory_space<vmem>>, %arg6: memref<256x256xf32, #tpu.memory_space<vmem>>, %arg7: memref<1x256xf32, #tpu.memory_space<vmem>>, %arg8: memref<256x256xf32, #tpu.memory_space<vmem>>, %arg9: memref<1x256xf32, #tpu.memory_space<vmem>>, %arg10: memref<8x384xf32, #tpu.memory_space<vmem>>) attributes {dimension_semantics = [#tpu.dimension_semantics<parallel>], iteration_bounds = array<i64: 1>, scalar_prefetch = 0 : i64, scratch_operands = 0 : i64, tpu.core_type = #tpu.core_type<tc>, window_params = [{transform_indices = @transform_0, window_bounds = array<i64: 1>}, {transform_indices = @transform_1, window_bounds = array<i64: 8, 128>}, {transform_indices = @transform_2, window_bounds = array<i64: 8, 128>}, {pipeline_mode = #tpu.pipeline_mode<synchronous>, transform_indices = @transform_3, window_bounds = array<i64: 128, 256>}, {pipeline_mode = #tpu.pipeline_mode<synchronous>, transform_indices = @transform_4, window_bounds = array<i64: 1, 256>}, {pipeline_mode = #tpu.pipeline_mode<synchronous>, transform_indices = @transform_5, window_bounds = array<i64: 256, 256>}, {pipeline_mode = #tpu.pipeline_mode<synchronous>, transform_indices = @transform_6, window_bounds = array<i64: 1, 256>}, {pipeline_mode = #tpu.pipeline_mode<synchronous>, transform_indices = @transform_7, window_bounds = array<i64: 256, 256>}, {pipeline_mode = #tpu.pipeline_mode<synchronous>, transform_indices = @transform_8, window_bounds = array<i64: 1, 256>}, {transform_indices = @transform_9, window_bounds = array<i64: 8, 384>}]} {
    %c0 = arith.constant 0 : index
    %c0_0 = arith.constant 0 : index
    %0 = vector.load %arg2[%c0, %c0_0] : memref<8x128xf32, #tpu.memory_space<vmem>>, vector<8x128xf32>
    %c0_1 = arith.constant 0 : index
    %c0_2 = arith.constant 0 : index
    %1 = vector.load %arg4[%c0_1, %c0_2] : memref<128x256xf32, #tpu.memory_space<vmem>>, vector<128x256xf32>
    %cst = arith.constant dense<0.000000e+00> : vector<8x256xf32>
    %2 = tpu.matmul %0, %1, %cst {dimension_numbers = #tpu.dot_dimension_numbers<[1], [0], [0], [1], [0, 0, 1, 1], [], []>} : vector<8x128xf32>, vector<128x256xf32>, vector<8x256xf32> -> vector<8x256xf32>
    %c0_3 = arith.constant 0 : index
    %c0_4 = arith.constant 0 : index
    %3 = vector.load %arg5[%c0_3, %c0_4] : memref<1x256xf32, #tpu.memory_space<vmem>>, vector<1x256xf32>
    %4 = vector.broadcast %3 : vector<1x256xf32> to vector<8x256xf32>
    %5 = arith.addf %2, %4 : vector<8x256xf32>
    %cst_5 = arith.constant 0.000000e+00 : f32
    %6 = vector.broadcast %cst_5 : f32 to vector<8x256xf32>
    %7 = arith.maximumf %5, %6 : vector<8x256xf32>
    %c0_6 = arith.constant 0 : index
    %c0_7 = arith.constant 0 : index
    %8 = vector.load %arg6[%c0_6, %c0_7] : memref<256x256xf32, #tpu.memory_space<vmem>>, vector<256x256xf32>
    %cst_8 = arith.constant dense<0.000000e+00> : vector<8x256xf32>
    %9 = tpu.matmul %7, %8, %cst_8 {dimension_numbers = #tpu.dot_dimension_numbers<[1], [0], [0], [1], [0, 0, 1, 1], [], []>} : vector<8x256xf32>, vector<256x256xf32>, vector<8x256xf32> -> vector<8x256xf32>
    %c0_9 = arith.constant 0 : index
    %c0_10 = arith.constant 0 : index
    %10 = vector.load %arg7[%c0_9, %c0_10] : memref<1x256xf32, #tpu.memory_space<vmem>>, vector<1x256xf32>
    %11 = vector.broadcast %10 : vector<1x256xf32> to vector<8x256xf32>
    %12 = arith.addf %9, %11 : vector<8x256xf32>
    %cst_11 = arith.constant 0.000000e+00 : f32
    %13 = vector.broadcast %cst_11 : f32 to vector<8x256xf32>
    %14 = arith.maximumf %12, %13 : vector<8x256xf32>
    %c0_12 = arith.constant 0 : index
    %c0_13 = arith.constant 0 : index
    %15 = vector.load %arg8[%c0_12, %c0_13] : memref<256x256xf32, #tpu.memory_space<vmem>>, vector<256x256xf32>
    %cst_14 = arith.constant dense<0.000000e+00> : vector<8x256xf32>
    %16 = tpu.matmul %14, %15, %cst_14 {dimension_numbers = #tpu.dot_dimension_numbers<[1], [0], [0], [1], [0, 0, 1, 1], [], []>} : vector<8x256xf32>, vector<256x256xf32>, vector<8x256xf32> -> vector<8x256xf32>
    %c0_15 = arith.constant 0 : index
    %c0_16 = arith.constant 0 : index
    %17 = vector.load %arg9[%c0_15, %c0_16] : memref<1x256xf32, #tpu.memory_space<vmem>>, vector<1x256xf32>
    %18 = vector.broadcast %17 : vector<1x256xf32> to vector<8x256xf32>
    %19 = arith.addf %16, %18 : vector<8x256xf32>
    %20 = vector.extract_strided_slice %19 {offsets = [0, 0], sizes = [8, 128], strides = [1, 1]} : vector<8x256xf32> to vector<8x128xf32>
    %21 = vector.extract_strided_slice %19 {offsets = [0, 128], sizes = [8, 128], strides = [1, 1]} : vector<8x256xf32> to vector<8x128xf32>
    %c0_17 = arith.constant 0 : index
    %c0_18 = arith.constant 0 : index
    %22 = vector.load %arg2[%c0_17, %c0_18] : memref<8x128xf32, #tpu.memory_space<vmem>>, vector<8x128xf32>
    %23 = arith.addf %20, %22 : vector<8x128xf32>
    %cst_19 = arith.constant 5.000000e-01 : f32
    %24 = vector.broadcast %cst_19 : f32 to vector<8x128xf32>
    %25 = arith.mulf %24, %21 : vector<8x128xf32>
    %26 = math.exp %25 : vector<8x128xf32>
    %c0_20 = arith.constant 0 : index
    %27 = memref.load %arg1[%c0_20] : memref<1xf32, #tpu.memory_space<smem>>
    %28 = vector.broadcast %27 : f32 to vector<8x128xf32>
    %29 = arith.mulf %28, %26 : vector<8x128xf32>
    %c0_21 = arith.constant 0 : index
    %c0_22 = arith.constant 0 : index
    %30 = vector.load %arg3[%c0_21, %c0_22] : memref<8x128xf32, #tpu.memory_space<vmem>>, vector<8x128xf32>
    %31 = arith.mulf %29, %30 : vector<8x128xf32>
    %32 = arith.addf %23, %31 : vector<8x128xf32>
    %c0_23 = arith.constant 0 : index
    %c0_24 = arith.constant 0 : index
    %33 = vector.load %arg10[%c0_23, %c0_24] : memref<8x384xf32, #tpu.memory_space<vmem>>, vector<8x128xf32>
    tpu.vector_store %arg10[%c0_23, %c0_24], %23 {strides = array<i32>} : memref<8x384xf32, #tpu.memory_space<vmem>>, vector<8x128xf32>,
    %c0_25 = arith.constant 0 : index
    %c128 = arith.constant 128 : index
    %34 = vector.load %arg10[%c0_25, %c128] : memref<8x384xf32, #tpu.memory_space<vmem>>, vector<8x128xf32>
    tpu.vector_store %arg10[%c0_25, %c128], %21 {strides = array<i32>} : memref<8x384xf32, #tpu.memory_space<vmem>>, vector<8x128xf32>,
    %c0_26 = arith.constant 0 : index
    %c256 = arith.constant 256 : index
    %35 = vector.load %arg10[%c0_26, %c256] : memref<8x384xf32, #tpu.memory_space<vmem>>, vector<8x128xf32>
    tpu.vector_store %arg10[%c0_26, %c256], %32 {strides = array<i32>} : memref<8x384xf32, #tpu.memory_space<vmem>>, vector<8x128xf32>,
    return
  }
  func.func @transform_0(%arg0: i32) -> i32 {
    %c0_i32 = arith.constant 0 : i32
    %c0_i32_0 = arith.constant 0 : i32
    return %c0_i32 : i32
  }
  func.func @transform_1(%arg0: i32) -> (i32, i32) {
    %c0_i32 = arith.constant 0 : i32
    %c0_i32_0 = arith.constant 0 : i32
    return %arg0, %c0_i32 : i32, i32
  }
  func.func @transform_2(%arg0: i32) -> (i32, i32) {
    %c0_i32 = arith.constant 0 : i32
    %c0_i32_0 = arith.constant 0 : i32
    return %arg0, %c0_i32 : i32, i32
  }
  func.func @transform_3(%arg0: i32) -> (i32, i32) {
    %c0_i32 = arith.constant 0 : i32
    %c0_i32_0 = arith.constant 0 : i32
    %c0_i32_1 = arith.constant 0 : i32
    return %c0_i32, %c0_i32_0 : i32, i32
  }
  func.func @transform_4(%arg0: i32) -> (i32, i32) {
    %c0_i32 = arith.constant 0 : i32
    %c0_i32_0 = arith.constant 0 : i32
    %c0_i32_1 = arith.constant 0 : i32
    return %c0_i32, %c0_i32_0 : i32, i32
  }
  func.func @transform_5(%arg0: i32) -> (i32, i32) {
    %c0_i32 = arith.constant 0 : i32
    %c0_i32_0 = arith.constant 0 : i32
    %c0_i32_1 = arith.constant 0 : i32
    return %c0_i32, %c0_i32_0 : i32, i32
  }
  func.func @transform_6(%arg0: i32) -> (i32, i32) {
    %c0_i32 = arith.constant 0 : i32
    %c0_i32_0 = arith.constant 0 : i32
    %c0_i32_1 = arith.constant 0 : i32
    return %c0_i32, %c0_i32_0 : i32, i32
  }
  func.func @transform_7(%arg0: i32) -> (i32, i32) {
    %c0_i32 = arith.constant 0 : i32
    %c0_i32_0 = arith.constant 0 : i32
    %c0_i32_1 = arith.constant 0 : i32
    return %c0_i32, %c0_i32_0 : i32, i32
  }
  func.func @transform_8(%arg0: i32) -> (i32, i32) {
    %c0_i32 = arith.constant 0 : i32
    %c0_i32_0 = arith.constant 0 : i32
    %c0_i32_1 = arith.constant 0 : i32
    return %c0_i32, %c0_i32_0 : i32, i32
  }
  func.func @transform_9(%arg0: i32) -> (i32, i32) {
    %c0_i32 = arith.constant 0 : i32
    %c0_i32_0 = arith.constant 0 : i32
    return %arg0, %c0_i32 : i32, i32
  }
}

</mosaic_0001>

<llo_original>
// kernel: p_forward_model_uniform.1
$region0: #{p_forward_model_uniform.1}
  #allocation0 [shape = 'u32[]', space=smem, size = 0x4, offset = 0x4, fixed_abs, tag = 'smem constant byte address 0x4 - core index']
  #allocation1 [shape = 'u32[144,128]{1,0:T(1,128)}', space=vmem, size = 0x12000, scoped, tag = 'internal scratch']
  #allocation2 [shape = 'f32[1]{0:T(128)S(6)}', space=smem, size = 0x200, scoped, tag = 'scoped memory for p_forward_model_uniform.1']
  %s0 = inlined_call_operand.<no memory space> [shape: f32[1], index: 0, kind: input, shape index: {}]
  %s1 = inlined_call_operand.vmem [shape: f32[8,128], index: 1, kind: input, shape index: {}]
  %s2 = inlined_call_operand.vmem [shape: f32[8,128], index: 2, kind: input, shape index: {}]
  %s3 = inlined_call_operand.hbm [shape: f32[128,256], index: 3, kind: input, shape index: {}]
  %s4 = inlined_call_operand.vmem [shape: f32[1,256], index: 4, kind: input, shape index: {}]
  %s5 = inlined_call_operand.hbm [shape: f32[256,256], index: 5, kind: input, shape index: {}]
  %s6 = inlined_call_operand.vmem [shape: f32[1,256], index: 6, kind: input, shape index: {}]
  %s7 = inlined_call_operand.hbm [shape: f32[256,256], index: 7, kind: input, shape index: {}]
  %s8 = inlined_call_operand.vmem [shape: f32[1,256], index: 8, kind: input, shape index: {}]
  %s9 = inlined_call_operand.vmem [shape: f32[8,384], index: 9, kind: output, shape index: {}]
  %s10 = sld [smem:[#allocation0]]
  $region58: #{p_forward_model_uniform.1} parent=0
    _
  %s12 = ssub.s32 1, %s10
  %s13 = scalar_select 0, %s12, %s10
  %14 = sst [smem:[#allocation2]] %s0
  $region1: #{p_forward_model_uniform.1} parent=0
    #allocation3 [shape = 'u8[131072]{0}', space=vmem, size = 0x20000, scoped, tag = 'input window, operand 3, single buffered']
    #allocation4 [shape = 's32[1]{0}', space=sflag, size = 0x4, scoped, tag = 'scoped memory for p_forward_model_uniform.1']
    #allocation5 [shape = 'u8[262144]{0}', space=vmem, size = 0x40000, scoped, tag = 'input window, operand 5, single buffered']
    #allocation6 [shape = 's32[1]{0}', space=sflag, size = 0x4, scoped, tag = 'scoped memory for p_forward_model_uniform.1']
    #allocation7 [shape = 'u8[262144]{0}', space=vmem, size = 0x40000, scoped, tag = 'input window, operand 7, single buffered']
    %15 = vsyncpa [#allocation4], 0
    %16 = vsyncpa [#allocation6], 0
    // Predicated region
    $region2: #{p_forward_model_uniform.1} parent=1 // pred_check
      _
    $region3: #{p_forward_model_uniform.1} parent=1 // pred_check_branch
      %18 = sbr.rel (0) target = $region5
    $region4: #{p_forward_model_uniform.1} parent=1 // pred_region
      _
    $region5: #{p_forward_model_uniform.1} parent=1 // pred_fallthru
      _
    // Predicated region
    $region6: #{p_forward_model_uniform.1} parent=1 // pred_check
      _
    $region7: #{p_forward_model_uniform.1} parent=1 // pred_check_branch
      %20 = sbr.rel (0) target = $region9
    $region8: #{p_forward_model_uniform.1} parent=1 // pred_region
      _
    $region9: #{p_forward_model_uniform.1} parent=1 // pred_fallthru
      _
    // Predicated region
    $region10: #{p_forward_model_uniform.1} parent=1 // pred_check
      _
    $region11: #{p_forward_model_uniform.1} parent=1 // pred_check_branch
      %22 = sbr.rel (0) target = $region13
    $region12: #{p_forward_model_uniform.1} parent=1 // pred_region
      _
    $region13: #{p_forward_model_uniform.1} parent=1 // pred_fallthru
      _
    // Predicated region
    $region14: #{p_forward_model_uniform.1} parent=1 // pred_check
      _
    $region15: #{p_forward_model_uniform.1} parent=1 // pred_check_branch
      %24 = sbr.rel (0) target = $region17
    $region16: #{p_forward_model_uniform.1} parent=1 // pred_region
      %s26 = ssub.s32 4096, 4096
      %27 = vsyncadd [#allocation4], %s26
      %s28 = sshll.u32 [#allocation3], 4
      %s29 = int_to_ptr.vmem [resolvable:$true] %s28
      %34 = dma.hbm_to_vmem [thread:$0]  %s3, 4096, %s29, [#allocation4], 256, 256, 16
    $region17: #{p_forward_model_uniform.1} parent=1 // pred_fallthru
      _
    // Predicated region
    $region18: #{p_forward_model_uniform.1} parent=1 // pred_check
      _
    $region19: #{p_forward_model_uniform.1} parent=1 // pred_check_branch
      %36 = sbr.rel (0) target = $region21
    $region20: #{p_forward_model_uniform.1} parent=1 // pred_region
      _
    $region21: #{p_forward_model_uniform.1} parent=1 // pred_fallthru
      _
    // Predicated region
    $region22: #{p_forward_model_uniform.1} parent=1 // pred_check
      _
    $region23: #{p_forward_model_uniform.1} parent=1 // pred_check_branch
      %38 = sbr.rel (0) target = $region25
    $region24: #{p_forward_model_uniform.1} parent=1 // pred_region
      %s40 = ssub.s32 8192, 8192
      %41 = vsyncadd [#allocation6], %s40
      %s42 = sshll.u32 [#allocation5], 4
      %s43 = int_to_ptr.vmem [resolvable:$true] %s42
      %48 = dma.hbm_to_vmem [thread:$0]  %s5, 8192, %s43, [#allocation6], 256, 256, 16
    $region25: #{p_forward_model_uniform.1} parent=1 // pred_fallthru
      _
    // Predicated region
    $region26: #{p_forward_model_uniform.1} parent=1 // pred_check
      _
    $region27: #{p_forward_model_uniform.1} parent=1 // pred_check_branch
      %50 = sbr.rel (0) target = $region29
    $region28: #{p_forward_model_uniform.1} parent=1 // pred_region
      _
    $region29: #{p_forward_model_uniform.1} parent=1 // pred_fallthru
      _
    // Predicated region
    $region30: #{p_forward_model_uniform.1} parent=1 // pred_check
      _
    $region31: #{p_forward_model_uniform.1} parent=1 // pred_check_branch
      %52 = sbr.rel (0) target = $region33
    $region32: #{p_forward_model_uniform.1} parent=1 // pred_region
      %s54 = ssub.s32 8192, 8192
      %55 = vsyncadd [#allocation6], %s54
      %s56 = sshll.u32 [#allocation7], 4
      %s57 = int_to_ptr.vmem [resolvable:$true] %s56
      %62 = dma.hbm_to_vmem [thread:$0]  %s7, 8192, %s57, [#allocation6], 256, 256, 16
    $region33: #{p_forward_model_uniform.1} parent=1 // pred_fallthru
      _
    // Predicated region
    $region34: #{p_forward_model_uniform.1} parent=1 // pred_check
      _
    $region35: #{p_forward_model_uniform.1} parent=1 // pred_check_branch
      %64 = sbr.rel (0) target = $region37
    $region36: #{p_forward_model_uniform.1} parent=1 // pred_region
      _
    $region37: #{p_forward_model_uniform.1} parent=1 // pred_fallthru
      _
    // Predicated region
    $region38: #{p_forward_model_uniform.1} parent=1 // pred_check
      _
    $region39: #{p_forward_model_uniform.1} parent=1 // pred_check_branch
      %66 = sbr.rel (0) target = $region41
    $region40: #{p_forward_model_uniform.1} parent=1 // pred_region
      %67 = dma.done [#allocation4], 4096
    $region41: #{p_forward_model_uniform.1} parent=1 // pred_fallthru
      _
    // Predicated region
    $region42: #{p_forward_model_uniform.1} parent=1 // pred_check
      _
    $region43: #{p_forward_model_uniform.1} parent=1 // pred_check_branch
      %69 = sbr.rel (0) target = $region45
    $region44: #{p_forward_model_uniform.1} parent=1 // pred_region
      %70 = dma.done [#allocation6], 8192
    $region45: #{p_forward_model_uniform.1} parent=1 // pred_fallthru
      _
    // Predicated region
    $region46: #{p_forward_model_uniform.1} parent=1 // pred_check
      _
    $region47: #{p_forward_model_uniform.1} parent=1 // pred_check_branch
      %72 = sbr.rel (0) target = $region49
    $region48: #{p_forward_model_uniform.1} parent=1 // pred_region
      %73 = dma.done [#allocation6], 8192
    $region49: #{p_forward_model_uniform.1} parent=1 // pred_fallthru
      _
    %v74 = vld [vmem:[%s1] sm:$0xff]
    %v75 = vld [vmem:[#allocation3] sm:$0xff]
    %v76 = vld [vmem:[#allocation3 + $0x8] sm:$0xff]
    %v77 = vld [vmem:[#allocation3 + $0x10] sm:$0xff]
    %v78 = vld [vmem:[#allocation3 + $0x18] sm:$0xff]
    %v79 = vld [vmem:[#allocation3 + $0x20] sm:$0xff]
    %v80 = vld [vmem:[#allocation3 + $0x28] sm:$0xff]
    %v81 = vld [vmem:[#allocation3 + $0x30] sm:$0xff]
    %v82 = vld [vmem:[#allocation3 + $0x38] sm:$0xff]
    %v83 = vld [vmem:[#allocation3 + $0x40] sm:$0xff]
    %v84 = vld [vmem:[#allocation3 + $0x48] sm:$0xff]
    %v85 = vld [vmem:[#allocation3 + $0x50] sm:$0xff]
    %v86 = vld [vmem:[#allocation3 + $0x58] sm:$0xff]
    %v87 = vld [vmem:[#allocation3 + $0x60] sm:$0xff]
    %v88 = vld [vmem:[#allocation3 + $0x68] sm:$0xff]
    %v89 = vld [vmem:[#allocation3 + $0x70] sm:$0xff]
    %v90 = vld [vmem:[#allocation3 + $0x78] sm:$0xff]
    %v91 = vld [vmem:[#allocation3 + $0x80] sm:$0xff]
    %v92 = vld [vmem:[#allocation3 + $0x88] sm:$0xff]
    %v93 = vld [vmem:[#allocation3 + $0x90] sm:$0xff]
    %v94 = vld [vmem:[#allocation3 + $0x98] sm:$0xff]
    %v95 = vld [vmem:[#allocation3 + $0xa0] sm:$0xff]
    %v96 = vld [vmem:[#allocation3 + $0xa8] sm:$0xff]
    %v97 = vld [vmem:[#allocation3 + $0xb0] sm:$0xff]
    %v98 = vld [vmem:[#allocation3 + $0xb8] sm:$0xff]
    %v99 = vld [vmem:[#allocation3 + $0xc0] sm:$0xff]
    %v100 = vld [vmem:[#allocation3 + $0xc8] sm:$0xff]
    %v101 = vld [vmem:[#allocation3 + $0xd0] sm:$0xff]
    %v102 = vld [vmem:[#allocation3 + $0xd8] sm:$0xff]
    %v103 = vld [vmem:[#allocation3 + $0xe0] sm:$0xff]
    %v104 = vld [vmem:[#allocation3 + $0xe8] sm:$0xff]
    %v105 = vld [vmem:[#allocation3 + $0xf0] sm:$0xff]
    %v106 = vld [vmem:[#allocation3 + $0xf8] sm:$0xff]
    %v107 = vld [vmem:[%s4] sm:$0x3]
    %v109 = vlaneseq
    %v110 = vshrl.u32 %v109, 7
    %v111 = vsub.s32 0, %v110
    %v112 = vrot.slane %v107, %v111
    %v113 = vlaneseq
    %v114 = vshrl.u32 %v113, 7
    %v115 = vsub.s32 1, %v114
    %v116 = vrot.slane %v107, %v115
    %119 = vmatprep.subr.mxu0 %v76
    %120 = vmatpush1.msra.mxu0 %v75
    %121 = vmatprep.subr.mxu0 %v78
    %122 = vmatpush1.msra.mxu0 %v77
    %123 = vmatprep.subr.mxu0 %v80
    %124 = vmatpush1.msra.mxu0 %v79
    %125 = vmatprep.subr.mxu0 %v82
    %126 = vmatpush1.msra.mxu0 %v81
    %127 = vmatprep.subr.mxu0 %v84
    %128 = vmatpush1.msra.mxu0 %v83
    %129 = vmatprep.subr.mxu0 %v86
    %130 = vmatpush1.msra.mxu0 %v85
    %131 = vmatprep.subr.mxu0 %v88
    %132 = vmatpush1.msra.mxu0 %v87
    %133 = vmatprep.subr.mxu0 %v90
    %134 = vmatpush1.msra.mxu0 %v89
    %135 = vmatprep.subr.mxu0 %v92
    %136 = vmatpush1.msra.mxu0 %v91
    %137 = vmatprep.subr.mxu0 %v94
    %138 = vmatpush1.msra.mxu0 %v93
    %139 = vmatprep.subr.mxu0 %v96
    %140 = vmatpush1.msra.mxu0 %v95
    %141 = vmatprep.subr.mxu0 %v98
    %142 = vmatpush1.msra.mxu0 %v97
    %143 = vmatprep.subr.mxu0 %v100
    %144 = vmatpush1.msra.mxu0 %v99
    %145 = vmatprep.subr.mxu0 %v102
    %146 = vmatpush1.msra.mxu0 %v101
    %147 = vmatprep.subr.mxu0 %v104
    %148 = vmatpush1.msra.mxu0 %v103
    %149 = vmatprep.subr.mxu0 %v106
    %150 = vmatpush1.msra.mxu0 %v105
    %151 = vmatprep.subr.mxu0 0.0
    %152 = vmatpush1.msra.mxu0 0.0
    %153 = vmatprep.subr.mxu0 0.0
    %154 = vmatpush1.msra.mxu0 0.0
    %155 = vmatprep.subr.mxu0 0.0
    %156 = vmatpush1.msra.mxu0 0.0
    %157 = vmatprep.subr.mxu0 0.0
    %158 = vmatpush1.msra.mxu0 0.0
    %159 = vmatprep.subr.mxu0 0.0
    %160 = vmatpush1.msra.mxu0 0.0
    %161 = vmatprep.subr.mxu0 0.0
    %162 = vmatpush1.msra.mxu0 0.0
    %163 = vmatprep.subr.mxu0 0.0
    %164 = vmatpush1.msra.mxu0 0.0
    %165 = vmatprep.subr.mxu0 0.0
    %166 = vmatpush1.msra.mxu0 0.0
    %167 = vmatprep.subr.mxu0 0.0
    %168 = vmatpush1.msra.mxu0 0.0
    %169 = vmatprep.subr.mxu0 0.0
    %170 = vmatpush1.msra.mxu0 0.0
    %171 = vmatprep.subr.mxu0 0.0
    %172 = vmatpush1.msra.mxu0 0.0
    %173 = vmatprep.subr.mxu0 0.0
    %174 = vmatpush1.msra.mxu0 0.0
    %175 = vmatprep.subr.mxu0 0.0
    %176 = vmatpush1.msra.mxu0 0.0
    %177 = vmatprep.subr.mxu0 0.0
    %178 = vmatpush1.msra.mxu0 0.0
    %179 = vmatprep.subr.mxu0 0.0
    %180 = vmatpush1.msra.mxu0 0.0
    %181 = vmatprep.subr.mxu0 0.0
    %182 = vmatpush1.msra.mxu0 0.0
    %183 = vmatprep.mubr.f32.mxu0 0.0
    %184 = vmatmul.mubr.f32.gmra.mrb[0].mxu0 %v74
    %v185 = vpop.f32.mrb[0].mxu0
    %v186 = vadd.f32 %v112, %v185
    %v187 = vpop.f32.mrb[0].mxu0
    %v188 = vadd.f32 %v116, %v187
    %189 = vdwg.mxu0
    %v190 = vmax.f32 %v186, 0.0
    %v191 = vmax.f32 %v188, 0.0
    %v192 = vld [vmem:[#allocation5] sm:$0xff]
    %v193 = vld [vmem:[#allocation5 + $0x8] sm:$0xff]
    %v194 = vld [vmem:[#allocation5 + $0x10] sm:$0xff]
    %v195 = vld [vmem:[#allocation5 + $0x18] sm:$0xff]
    %v196 = vld [vmem:[#allocation5 + $0x20] sm:$0xff]
    %v197 = vld [vmem:[#allocation5 + $0x28] sm:$0xff]
    %v198 = vld [vmem:[#allocation5 + $0x30] sm:$0xff]
    %v199 = vld [vmem:[#allocation5 + $0x38] sm:$0xff]
    %v200 = vld [vmem:[#allocation5 + $0x40] sm:$0xff]
    %v201 = vld [vmem:[#allocation5 + $0x48] sm:$0xff]
    %v202 = vld [vmem:[#allocation5 + $0x50] sm:$0xff]
    %v203 = vld [vmem:[#allocation5 + $0x58] sm:$0xff]
    %v204 = vld [vmem:[#allocation5 + $0x60] sm:$0xff]
    %v205 = vld [vmem:[#allocation5 + $0x68] sm:$0xff]
    %v206 = vld [vmem:[#allocation5 + $0x70] sm:$0xff]
    %v207 = vld [vmem:[#allocation5 + $0x78] sm:$0xff]
    %v208 = vld [vmem:[#allocation5 + $0x80] sm:$0xff]
    %v209 = vld [vmem:[#allocation5 + $0x88] sm:$0xff]
    %v210 = vld [vmem:[#allocation5 + $0x90] sm:$0xff]
    %v211 = vld [vmem:[#allocation5 + $0x98] sm:$0xff]
    %v212 = vld [vmem:[#allocation5 + $0xa0] sm:$0xff]
    %v213 = vld [vmem:[#allocation5 + $0xa8] sm:$0xff]
    %v214 = vld [vmem:[#allocation5 + $0xb0] sm:$0xff]
    %v215 = vld [vmem:[#allocation5 + $0xb8] sm:$0xff]
    %v216 = vld [vmem:[#allocation5 + $0xc0] sm:$0xff]
    %v217 = vld [vmem:[#allocation5 + $0xc8] sm:$0xff]
    %v218 = vld [vmem:[#allocation5 + $0xd0] sm:$0xff]
    %v219 = vld [vmem:[#allocation5 + $0xd8] sm:$0xff]
    %v220 = vld [vmem:[#allocation5 + $0xe0] sm:$0xff]
    %v221 = vld [vmem:[#allocation5 + $0xe8] sm:$0xff]
    %v222 = vld [vmem:[#allocation5 + $0xf0] sm:$0xff]
    %v223 = vld [vmem:[#allocation5 + $0xf8] sm:$0xff]
    %v224 = vld [vmem:[#allocation5 + $0x100] sm:$0xff]
    %v225 = vld [vmem:[#allocation5 + $0x108] sm:$0xff]
    %v226 = vld [vmem:[#allocation5 + $0x110] sm:$0xff]
    %v227 = vld [vmem:[#allocation5 + $0x118] sm:$0xff]
    %v228 = vld [vmem:[#allocation5 + $0x120] sm:$0xff]
    %v229 = vld [vmem:[#allocation5 + $0x128] sm:$0xff]
    %v230 = vld [vmem:[#allocation5 + $0x130] sm:$0xff]
    %v231 = vld [vmem:[#allocation5 + $0x138] sm:$0xff]
    %v232 = vld [vmem:[#allocation5 + $0x140] sm:$0xff]
    %v233 = vld [vmem:[#allocation5 + $0x148] sm:$0xff]
    %v234 = vld [vmem:[#allocation5 + $0x150] sm:$0xff]
    %v235 = vld [vmem:[#allocation5 + $0x158] sm:$0xff]
    %v236 = vld [vmem:[#allocation5 + $0x160] sm:$0xff]
    %v237 = vld [vmem:[#allocation5 + $0x168] sm:$0xff]
    %v238 = vld [vmem:[#allocation5 + $0x170] sm:$0xff]
    %v239 = vld [vmem:[#allocation5 + $0x178] sm:$0xff]
    %v240 = vld [vmem:[#allocation5 + $0x180] sm:$0xff]
    %v241 = vld [vmem:[#allocation5 + $0x188] sm:$0xff]
    %v242 = vld [vmem:[#allocation5 + $0x190] sm:$0xff]
    %v243 = vld [vmem:[#allocation5 + $0x198] sm:$0xff]
    %v244 = vld [vmem:[#allocation5 + $0x1a0] sm:$0xff]
    %v245 = vld [vmem:[#allocation5 + $0x1a8] sm:$0xff]
    %v246 = vld [vmem:[#allocation5 + $0x1b0] sm:$0xff]
    %v247 = vld [vmem:[#allocation5 + $0x1b8] sm:$0xff]
    %v248 = vld [vmem:[#allocation5 + $0x1c0] sm:$0xff]
    %v249 = vld [vmem:[#allocation5 + $0x1c8] sm:$0xff]
    %v250 = vld [vmem:[#allocation5 + $0x1d0] sm:$0xff]
    %v251 = vld [vmem:[#allocation5 + $0x1d8] sm:$0xff]
    %v252 = vld [vmem:[#allocation5 + $0x1e0] sm:$0xff]
    %v253 = vld [vmem:[#allocation5 + $0x1e8] sm:$0xff]
    %v254 = vld [vmem:[#allocation5 + $0x1f0] sm:$0xff]
    %v255 = vld [vmem:[#allocation5 + $0x1f8] sm:$0xff]
    %v256 = vld [vmem:[%s6] sm:$0x3]
    %v258 = vlaneseq
    %v259 = vshrl.u32 %v258, 7
    %v260 = vsub.s32 0, %v259
    %v261 = vrot.slane %v256, %v260
    %v262 = vlaneseq
    %v263 = vshrl.u32 %v262, 7
    %v264 = vsub.s32 1, %v263
    %v265 = vrot.slane %v256, %v264
    %268 = vmatprep.subr.mxu0 %v193
    %269 = vmatpush1.msra.mxu0 %v192
    %270 = vmatprep.subr.mxu0 %v195
    %271 = vmatpush1.msra.mxu0 %v194
    %272 = vmatprep.subr.mxu0 %v197
    %273 = vmatpush1.msra.mxu0 %v196
    %274 = vmatprep.subr.mxu0 %v199
    %275 = vmatpush1.msra.mxu0 %v198
    %276 = vmatprep.subr.mxu0 %v201
    %277 = vmatpush1.msra.mxu0 %v200
    %278 = vmatprep.subr.mxu0 %v203
    %279 = vmatpush1.msra.mxu0 %v202
    %280 = vmatprep.subr.mxu0 %v205
    %281 = vmatpush1.msra.mxu0 %v204
    %282 = vmatprep.subr.mxu0 %v207
    %283 = vmatpush1.msra.mxu0 %v206
    %284 = vmatprep.subr.mxu0 %v209
    %285 = vmatpush1.msra.mxu0 %v208
    %286 = vmatprep.subr.mxu0 %v211
    %287 = vmatpush1.msra.mxu0 %v210
    %288 = vmatprep.subr.mxu0 %v213
    %289 = vmatpush1.msra.mxu0 %v212
    %290 = vmatprep.subr.mxu0 %v215
    %291 = vmatpush1.msra.mxu0 %v214
    %292 = vmatprep.subr.mxu0 %v217
    %293 = vmatpush1.msra.mxu0 %v216
    %294 = vmatprep.subr.mxu0 %v219
    %295 = vmatpush1.msra.mxu0 %v218
    %296 = vmatprep.subr.mxu0 %v221
    %297 = vmatpush1.msra.mxu0 %v220
    %298 = vmatprep.subr.mxu0 %v223
    %299 = vmatpush1.msra.mxu0 %v222
    %300 = vmatprep.subr.mxu0 %v225
    %301 = vmatpush1.msra.mxu0 %v224
    %302 = vmatprep.subr.mxu0 %v227
    %303 = vmatpush1.msra.mxu0 %v226
    %304 = vmatprep.subr.mxu0 %v229
    %305 = vmatpush1.msra.mxu0 %v228
    %306 = vmatprep.subr.mxu0 %v231
    %307 = vmatpush1.msra.mxu0 %v230
    %308 = vmatprep.subr.mxu0 %v233
    %309 = vmatpush1.msra.mxu0 %v232
    %310 = vmatprep.subr.mxu0 %v235
    %311 = vmatpush1.msra.mxu0 %v234
    %312 = vmatprep.subr.mxu0 %v237
    %313 = vmatpush1.msra.mxu0 %v236
    %314 = vmatprep.subr.mxu0 %v239
    %315 = vmatpush1.msra.mxu0 %v238
    %316 = vmatprep.subr.mxu0 %v241
    %317 = vmatpush1.msra.mxu0 %v240
    %318 = vmatprep.subr.mxu0 %v243
    %319 = vmatpush1.msra.mxu0 %v242
    %320 = vmatprep.subr.mxu0 %v245
    %321 = vmatpush1.msra.mxu0 %v244
    %322 = vmatprep.subr.mxu0 %v247
    %323 = vmatpush1.msra.mxu0 %v246
    %324 = vmatprep.subr.mxu0 %v249
    %325 = vmatpush1.msra.mxu0 %v248
    %326 = vmatprep.subr.mxu0 %v251
    %327 = vmatpush1.msra.mxu0 %v250
    %328 = vmatprep.subr.mxu0 %v253
    %329 = vmatpush1.msra.mxu0 %v252
    %330 = vmatprep.subr.mxu0 %v255
    %331 = vmatpush1.msra.mxu0 %v254
    %332 = vmatprep.mubr.f32.mxu0 %v191
    %333 = vmatmul.mubr.f32.gmra.mrb[0].mxu0 %v190
    %v334 = vpop.f32.mrb[0].mxu0
    %v335 = vadd.f32 %v261, %v334
    %v336 = vpop.f32.mrb[0].mxu0
    %v337 = vadd.f32 %v265, %v336
    %338 = vdwg.mxu0
    %v339 = vmax.f32 %v335, 0.0
    %v340 = vmax.f32 %v337, 0.0
    %v341 = vld [vmem:[#allocation7] sm:$0xff]
    %v342 = vld [vmem:[#allocation7 + $0x8] sm:$0xff]
    %v343 = vld [vmem:[#allocation7 + $0x10] sm:$0xff]
    %v344 = vld [vmem:[#allocation7 + $0x18] sm:$0xff]
    %v345 = vld [vmem:[#allocation7 + $0x20] sm:$0xff]
    %v346 = vld [vmem:[#allocation7 + $0x28] sm:$0xff]
    %v347 = vld [vmem:[#allocation7 + $0x30] sm:$0xff]
    %v348 = vld [vmem:[#allocation7 + $0x38] sm:$0xff]
    %v349 = vld [vmem:[#allocation7 + $0x40] sm:$0xff]
    %v350 = vld [vmem:[#allocation7 + $0x48] sm:$0xff]
    %v351 = vld [vmem:[#allocation7 + $0x50] sm:$0xff]
    %v352 = vld [vmem:[#allocation7 + $0x58] sm:$0xff]
    %v353 = vld [vmem:[#allocation7 + $0x60] sm:$0xff]
    %v354 = vld [vmem:[#allocation7 + $0x68] sm:$0xff]
    %v355 = vld [vmem:[#allocation7 + $0x70] sm:$0xff]
    %v356 = vld [vmem:[#allocation7 + $0x78] sm:$0xff]
    %v357 = vld [vmem:[#allocation7 + $0x80] sm:$0xff]
    %v358 = vld [vmem:[#allocation7 + $0x88] sm:$0xff]
    %v359 = vld [vmem:[#allocation7 + $0x90] sm:$0xff]
    %v360 = vld [vmem:[#allocation7 + $0x98] sm:$0xff]
    %v361 = vld [vmem:[#allocation7 + $0xa0] sm:$0xff]
    %v362 = vld [vmem:[#allocation7 + $0xa8] sm:$0xff]
    %v363 = vld [vmem:[#allocation7 + $0xb0] sm:$0xff]
    %v364 = vld [vmem:[#allocation7 + $0xb8] sm:$0xff]
    %v365 = vld [vmem:[#allocation7 + $0xc0] sm:$0xff]
    %v366 = vld [vmem:[#allocation7 + $0xc8] sm:$0xff]
    %v367 = vld [vmem:[#allocation7 + $0xd0] sm:$0xff]
    %v368 = vld [vmem:[#allocation7 + $0xd8] sm:$0xff]
    %v369 = vld [vmem:[#allocation7 + $0xe0] sm:$0xff]
    %v370 = vld [vmem:[#allocation7 + $0xe8] sm:$0xff]
    %v371 = vld [vmem:[#allocation7 + $0xf0] sm:$0xff]
    %v372 = vld [vmem:[#allocation7 + $0xf8] sm:$0xff]
    %v373 = vld [vmem:[#allocation7 + $0x100] sm:$0xff]
    %v374 = vld [vmem:[#allocation7 + $0x108] sm:$0xff]
    %v375 = vld [vmem:[#allocation7 + $0x110] sm:$0xff]
    %v376 = vld [vmem:[#allocation7 + $0x118] sm:$0xff]
    %v377 = vld [vmem:[#allocation7 + $0x120] sm:$0xff]
    %v378 = vld [vmem:[#allocation7 + $0x128] sm:$0xff]
    %v379 = vld [vmem:[#allocation7 + $0x130] sm:$0xff]
    %v380 = vld [vmem:[#allocation7 + $0x138] sm:$0xff]
    %v381 = vld [vmem:[#allocation7 + $0x140] sm:$0xff]
    %v382 = vld [vmem:[#allocation7 + $0x148] sm:$0xff]
    %v383 = vld [vmem:[#allocation7 + $0x150] sm:$0xff]
    %v384 = vld [vmem:[#allocation7 + $0x158] sm:$0xff]
    %v385 = vld [vmem:[#allocation7 + $0x160] sm:$0xff]
    %v386 = vld [vmem:[#allocation7 + $0x168] sm:$0xff]
    %v387 = vld [vmem:[#allocation7 + $0x170] sm:$0xff]
    %v388 = vld [vmem:[#allocation7 + $0x178] sm:$0xff]
    %v389 = vld [vmem:[#allocation7 + $0x180] sm:$0xff]
    %v390 = vld [vmem:[#allocation7 + $0x188] sm:$0xff]
    %v391 = vld [vmem:[#allocation7 + $0x190] sm:$0xff]
    %v392 = vld [vmem:[#allocation7 + $0x198] sm:$0xff]
    %v393 = vld [vmem:[#allocation7 + $0x1a0] sm:$0xff]
    %v394 = vld [vmem:[#allocation7 + $0x1a8] sm:$0xff]
    %v395 = vld [vmem:[#allocation7 + $0x1b0] sm:$0xff]
    %v396 = vld [vmem:[#allocation7 + $0x1b8] sm:$0xff]
    %v397 = vld [vmem:[#allocation7 + $0x1c0] sm:$0xff]
    %v398 = vld [vmem:[#allocation7 + $0x1c8] sm:$0xff]
    %v399 = vld [vmem:[#allocation7 + $0x1d0] sm:$0xff]
    %v400 = vld [vmem:[#allocation7 + $0x1d8] sm:$0xff]
    %v401 = vld [vmem:[#allocation7 + $0x1e0] sm:$0xff]
    %v402 = vld [vmem:[#allocation7 + $0x1e8] sm:$0xff]
    %v403 = vld [vmem:[#allocation7 + $0x1f0] sm:$0xff]
    %v404 = vld [vmem:[#allocation7 + $0x1f8] sm:$0xff]
    %v405 = vld [vmem:[%s8] sm:$0x3]
    %v407 = vlaneseq
    %v408 = vshrl.u32 %v407, 7
    %v409 = vsub.s32 0, %v408
    %v410 = vrot.slane %v405, %v409
    %v411 = vlaneseq
    %v412 = vshrl.u32 %v411, 7
    %v413 = vsub.s32 1, %v412
    %v414 = vrot.slane %v405, %v413
    %417 = vmatprep.subr.mxu0 %v342
    %418 = vmatpush1.msra.mxu0 %v341
    %419 = vmatprep.subr.mxu0 %v344
    %420 = vmatpush1.msra.mxu0 %v343
    %421 = vmatprep.subr.mxu0 %v346
    %422 = vmatpush1.msra.mxu0 %v345
    %423 = vmatprep.subr.mxu0 %v348
    %424 = vmatpush1.msra.mxu0 %v347
    %425 = vmatprep.subr.mxu0 %v350
    %426 = vmatpush1.msra.mxu0 %v349
    %427 = vmatprep.subr.mxu0 %v352
    %428 = vmatpush1.msra.mxu0 %v351
    %429 = vmatprep.subr.mxu0 %v354
    %430 = vmatpush1.msra.mxu0 %v353
    %431 = vmatprep.subr.mxu0 %v356
    %432 = vmatpush1.msra.mxu0 %v355
    %433 = vmatprep.subr.mxu0 %v358
    %434 = vmatpush1.msra.mxu0 %v357
    %435 = vmatprep.subr.mxu0 %v360
    %436 = vmatpush1.msra.mxu0 %v359
    %437 = vmatprep.subr.mxu0 %v362
    %438 = vmatpush1.msra.mxu0 %v361
    %439 = vmatprep.subr.mxu0 %v364
    %440 = vmatpush1.msra.mxu0 %v363
    %441 = vmatprep.subr.mxu0 %v366
    %442 = vmatpush1.msra.mxu0 %v365
    %443 = vmatprep.subr.mxu0 %v368
    %444 = vmatpush1.msra.mxu0 %v367
    %445 = vmatprep.subr.mxu0 %v370
    %446 = vmatpush1.msra.mxu0 %v369
    %447 = vmatprep.subr.mxu0 %v372
    %448 = vmatpush1.msra.mxu0 %v371
    %449 = vmatprep.subr.mxu0 %v374
    %450 = vmatpush1.msra.mxu0 %v373
    %451 = vmatprep.subr.mxu0 %v376
    %452 = vmatpush1.msra.mxu0 %v375
    %453 = vmatprep.subr.mxu0 %v378
    %454 = vmatpush1.msra.mxu0 %v377
    %455 = vmatprep.subr.mxu0 %v380
    %456 = vmatpush1.msra.mxu0 %v379
    %457 = vmatprep.subr.mxu0 %v382
    %458 = vmatpush1.msra.mxu0 %v381
    %459 = vmatprep.subr.mxu0 %v384
    %460 = vmatpush1.msra.mxu0 %v383
    %461 = vmatprep.subr.mxu0 %v386
    %462 = vmatpush1.msra.mxu0 %v385
    %463 = vmatprep.subr.mxu0 %v388
    %464 = vmatpush1.msra.mxu0 %v387
    %465 = vmatprep.subr.mxu0 %v390
    %466 = vmatpush1.msra.mxu0 %v389
    %467 = vmatprep.subr.mxu0 %v392
    %468 = vmatpush1.msra.mxu0 %v391
    %469 = vmatprep.subr.mxu0 %v394
    %470 = vmatpush1.msra.mxu0 %v393
    %471 = vmatprep.subr.mxu0 %v396
    %472 = vmatpush1.msra.mxu0 %v395
    %473 = vmatprep.subr.mxu0 %v398
    %474 = vmatpush1.msra.mxu0 %v397
    %475 = vmatprep.subr.mxu0 %v400
    %476 = vmatpush1.msra.mxu0 %v399
    %477 = vmatprep.subr.mxu0 %v402
    %478 = vmatpush1.msra.mxu0 %v401
    %479 = vmatprep.subr.mxu0 %v404
    %480 = vmatpush1.msra.mxu0 %v403
    %481 = vmatprep.mubr.f32.mxu0 %v340
    %482 = vmatmul.mubr.f32.gmra.mrb[0].mxu0 %v339
    %v483 = vpop.f32.mrb[0].mxu0
    %v484 = vadd.f32 %v410, %v483
    %v485 = vpop.f32.mrb[0].mxu0
    %v486 = vadd.f32 %v414, %v485
    %487 = vdwg.mxu0
    %v488 = vadd.f32 %v484, %v74
    %v489 = vmul.f32 %v486, 0.5
    %v490 = vmul.f32 %v489, 1.442695
    %v491 = vpow.pop %v490
    %s492 = sld [smem:[#allocation2]]
    %v493 = vstv %s492
    %v494 = vmul.f32 %v493, %v491
    %v495 = vld [vmem:[%s2] sm:$0xff]
    %v496 = vmul.f32 %v494, %v495
    %v497 = vadd.f32 %v488, %v496
    %498 = vst [vmem:[%s9] sm:$0xff] %v488
    %499 = vst [vmem:[%s9 + $0x8] sm:$0xff] %v486
    %500 = vst [vmem:[%s9 + $0x10] sm:$0xff] %v497
    // Predicated region
    $region50: #{p_forward_model_uniform.1} parent=1 // pred_check
      _
    $region51: #{p_forward_model_uniform.1} parent=1 // pred_check_branch
      %502 = sbr.rel (0) target = $region53
    $region52: #{p_forward_model_uniform.1} parent=1 // pred_region
      _
    $region53: #{p_forward_model_uniform.1} parent=1 // pred_fallthru
      _
    // Predicated region
    $region54: #{p_forward_model_uniform.1} parent=1 // pred_check
      _
    $region55: #{p_forward_model_uniform.1} parent=1 // pred_check_branch
      %504 = sbr.rel (0) target = $region57
    $region56: #{p_forward_model_uniform.1} parent=1 // pred_region
      _
    $region57: #{p_forward_model_uniform.1} parent=1 // pred_fallthru
      _
    %505 = vsyncpa [#allocation4], 1
    %506 = vsyncpa [#allocation6], 1

</llo_original>
